<compile_context>
chip_gen: v6e
topology: v6e:2x2x1
jax: 0.10.0
libtpu: 0.0.40
codegen_flags: <defaults>
</compile_context>

<pallas_src>
import jax
import jax.numpy as jnp
from jax.experimental import pallas as pl
from jax.experimental.pallas import tpu as pltpu

IN_DIM = 1 * 28 * 28   # 784
H1 = 200               # fc1 hidden size for 'mnist'
DIMS_FEATURE = 32      # args.dims_feature
N_CLS = 10

H1_PAD = 256           # padded fc1 width  (multiple of 128)
OUT_PAD = 128          # padded output lane width for feat / logits
DEFAULT_TB = 256       # batch tile (rows) for large batches


def _mlp_kernel(x_ref, w1_ref, b1_ref, w2_ref, b2_ref, w23_ref, b23_ref,
                feat_ref, logit_ref):
    # fc1 + ReLU  (bf16 operands on the MXU, f32 accumulate, f32 epilogue)
    x = x_ref[...]                                                   # (TB, 784) bf16
    h1 = jnp.dot(x, w1_ref[...], preferred_element_type=jnp.float32)
    h1 = jnp.maximum(h1 + b1_ref[...], 0.0)                          # (TB, 256) f32
    h1b = h1.astype(jnp.bfloat16)

    # fc2 -> y_feature (padded to 128 lanes; lanes 32: are zero by construction)
    feat = jnp.dot(h1b, w2_ref[...], preferred_element_type=jnp.float32) + b2_ref[...]
    # fused classifier: logits = h1 @ (w2 @ w3) + (b2 @ w3 + b3)
    logits = jnp.dot(h1b, w23_ref[...], preferred_element_type=jnp.float32) + b23_ref[...]

    feat_ref[...] = feat.astype(feat_ref.dtype)
    logit_ref[...] = logits.astype(logit_ref.dtype)


def client_model_mnist_forward(x_nchw, params, *, tb=DEFAULT_TB):
    """x_nchw: (B, 1, 28, 28) float32.
    Returns (y_feature (B, DIMS_FEATURE), logits (B, N_CLS)) in float32."""
    w1, b1, w2, b2, w3, b3 = params
    B = x_nchw.shape[0]
    x2d = x_nchw.reshape(B, IN_DIM)            # same as x.view(-1, 784)

    # ---- parameter prep (pure JAX, f32): fuse classifier, zero-pad, cast bf16 ----
    w23 = w2 @ w3                              # (200, 10)
    b23 = b2 @ w3 + b3                         # (1, 10)

    w1p = jnp.zeros((IN_DIM, H1_PAD), jnp.float32).at[:, :H1].set(w1).astype(jnp.bfloat16)
    b1p = jnp.zeros((1, H1_PAD), jnp.float32).at[:, :H1].set(b1)
    w2p = jnp.zeros((H1_PAD, OUT_PAD), jnp.float32).at[:H1, :DIMS_FEATURE].set(w2).astype(jnp.bfloat16)
    b2p = jnp.zeros((1, OUT_PAD), jnp.float32).at[:, :DIMS_FEATURE].set(b2)
    w23p = jnp.zeros((H1_PAD, OUT_PAD), jnp.float32).at[:H1, :N_CLS].set(w23).astype(jnp.bfloat16)
    b23p = jnp.zeros((1, OUT_PAD), jnp.float32).at[:, :N_CLS].set(b23)

    # ---- batch tiling: whole batch if small, else fixed TB tiles (pad B up) ----
    if B <= tb:
        TB, BP = B, B
        xp = x2d
    else:
        TB = tb
        BP = pl.cdiv(B, TB) * TB
        xp = jnp.zeros((BP, IN_DIM), x2d.dtype).at[:B].set(x2d)
    xp = xp.astype(jnp.bfloat16)

    grid = (pl.cdiv(BP, TB),)
    tiled = lambda shape: pl.BlockSpec(shape, lambda i: (i, 0))   # per-batch-tile blocks
    const = lambda shape: pl.BlockSpec(shape, lambda i: (0, 0))   # weights stay resident

    cost = pl.CostEstimate(
        flops=2 * BP * (IN_DIM * H1_PAD + 2 * H1_PAD * OUT_PAD),
        transcendentals=0,
        bytes_accessed=(xp.size * 2
                        + (w1p.size + w2p.size + w23p.size) * 2
                        + (b1p.size + b2p.size + b23p.size) * 4
                        + 2 * BP * OUT_PAD * 4),
    )

    feat_pad, logit_pad = pl.pallas_call(
        _mlp_kernel,
        out_shape=(
            jax.ShapeDtypeStruct((BP, OUT_PAD), jnp.float32),
            jax.ShapeDtypeStruct((BP, OUT_PAD), jnp.float32),
        ),
        grid=grid,
        in_specs=[
            tiled((TB, IN_DIM)),
            const((IN_DIM, H1_PAD)), const((1, H1_PAD)),
            const((H1_PAD, OUT_PAD)), const((1, OUT_PAD)),
            const((H1_PAD, OUT_PAD)), const((1, OUT_PAD)),
        ],
        out_specs=[
            tiled((TB, OUT_PAD)),
            tiled((TB, OUT_PAD)),
        ],
        compiler_params=pltpu.CompilerParams(
            dimension_semantics=("parallel",)),
        cost_estimate=cost,
    )(xp, w1p, b1p, w2p, b2p, w23p, b23p)

    y_feature = feat_pad[:B, :DIMS_FEATURE]
    logits = logit_pad[:B, :N_CLS]
    return y_feature, logits


def init_params(key):
    """Deterministic init mimicking nn.Linear's U(-1/sqrt(fan_in), 1/sqrt(fan_in)).
    Weights stored as (in_features, out_features) so the forward does x @ W."""
    ks = jax.random.split(key, 6)

    def linear(kw, kb, n_in, n_out):
        bound = 1.0 / jnp.sqrt(n_in)
        w = jax.random.uniform(kw, (n_in, n_out), jnp.float32, -bound, bound)
        b = jax.random.uniform(kb, (1, n_out), jnp.float32, -bound, bound)
        return w, b

    w1, b1 = linear(ks[0], ks[1], IN_DIM, H1)
    w2, b2 = linear(ks[2], ks[3], H1, DIMS_FEATURE)
    w3, b3 = linear(ks[4], ks[5], DIMS_FEATURE, N_CLS)
    return (w1, b1, w2, b2, w3, b3)


if __name__ == "__main__":
    key = jax.random.PRNGKey(0)
    k_x, k_p = jax.random.split(key)

    B = 2
    x = jax.random.normal(k_x, (B, 1, 28, 28), dtype=jnp.float32)
    params = init_params(k_p)

    y_feature, logits = client_model_mnist_forward(x, params)
    jax.block_until_ready((y_feature, logits))

    # Sanity check against plain-JAX f32 reference of the PyTorch forward.
    # Kernel uses bf16 matmul operands (f32 accumulation), so tolerances are
    # loosened accordingly.
    x2d = x.reshape(B, IN_DIM)
    w1, b1, w2, b2, w3, b3 = params
    h1 = jnp.maximum(x2d @ w1 + b1, 0.0)
    feat_ref = h1 @ w2 + b2
    logit_ref = feat_ref @ w3 + b3
    assert y_feature.shape == (B, DIMS_FEATURE) and logits.shape == (B, N_CLS)
    assert jnp.allclose(y_feature, feat_ref, atol=3e-2, rtol=3e-2)
    assert jnp.allclose(logits, logit_ref, atol=3e-2, rtol=3e-2)

    print("KERNEL_OK")
</pallas_src>

<mosaic_0001>
module attributes {stable_mosaic.version = 11 : i64} {
  func.func @_mlp_kernel(%arg0: i32, %arg1: memref<2x784xbf16, #tpu.memory_space<vmem>>, %arg2: memref<784x256xbf16, #tpu.memory_space<vmem>>, %arg3: memref<1x256xf32, #tpu.memory_space<vmem>>, %arg4: memref<256x128xbf16, #tpu.memory_space<vmem>>, %arg5: memref<1x128xf32, #tpu.memory_space<vmem>>, %arg6: memref<256x128xbf16, #tpu.memory_space<vmem>>, %arg7: memref<1x128xf32, #tpu.memory_space<vmem>>, %arg8: memref<2x128xf32, #tpu.memory_space<vmem>>, %arg9: memref<2x128xf32, #tpu.memory_space<vmem>>) attributes {dimension_semantics = [#tpu.dimension_semantics<parallel>], iteration_bounds = array<i64: 1>, scalar_prefetch = 0 : i64, scratch_operands = 0 : i64, tpu.core_type = #tpu.core_type<tc>, window_params = [{transform_indices = @transform_0, window_bounds = array<i64: 2, 784>}, {pipeline_mode = #tpu.pipeline_mode<synchronous>, transform_indices = @transform_1, window_bounds = array<i64: 784, 256>}, {pipeline_mode = #tpu.pipeline_mode<synchronous>, transform_indices = @transform_2, window_bounds = array<i64: 1, 256>}, {pipeline_mode = #tpu.pipeline_mode<synchronous>, transform_indices = @transform_3, window_bounds = array<i64: 256, 128>}, {pipeline_mode = #tpu.pipeline_mode<synchronous>, transform_indices = @transform_4, window_bounds = array<i64: 1, 128>}, {pipeline_mode = #tpu.pipeline_mode<synchronous>, transform_indices = @transform_5, window_bounds = array<i64: 256, 128>}, {pipeline_mode = #tpu.pipeline_mode<synchronous>, transform_indices = @transform_6, window_bounds = array<i64: 1, 128>}, {transform_indices = @transform_7, window_bounds = array<i64: 2, 128>}, {transform_indices = @transform_8, window_bounds = array<i64: 2, 128>}]} {
    %c0 = arith.constant 0 : index
    %c0_0 = arith.constant 0 : index
    %0 = vector.load %arg1[%c0, %c0_0] : memref<2x784xbf16, #tpu.memory_space<vmem>>, vector<2x784xbf16>
    %c0_1 = arith.constant 0 : index
    %c0_2 = arith.constant 0 : index
    %1 = vector.load %arg2[%c0_1, %c0_2] : memref<784x256xbf16, #tpu.memory_space<vmem>>, vector<784x256xbf16>
    %cst = arith.constant dense<0.000000e+00> : vector<2x256xf32>
    %2 = tpu.matmul %0, %1, %cst {dimension_numbers = #tpu.dot_dimension_numbers<[1], [0], [0], [1], [0, 0, 1, 1], [], []>} : vector<2x784xbf16>, vector<784x256xbf16>, vector<2x256xf32> -> vector<2x256xf32>
    %c0_3 = arith.constant 0 : index
    %c0_4 = arith.constant 0 : index
    %3 = vector.load %arg3[%c0_3, %c0_4] : memref<1x256xf32, #tpu.memory_space<vmem>>, vector<1x256xf32>
    %4 = vector.broadcast %3 : vector<1x256xf32> to vector<2x256xf32>
    %5 = arith.addf %2, %4 : vector<2x256xf32>
    %cst_5 = arith.constant 0.000000e+00 : f32
    %6 = vector.broadcast %cst_5 : f32 to vector<2x256xf32>
    %7 = arith.maximumf %5, %6 : vector<2x256xf32>
    %8 = arith.truncf %7 : vector<2x256xf32> to vector<2x256xbf16>
    %c0_6 = arith.constant 0 : index
    %c0_7 = arith.constant 0 : index
    %9 = vector.load %arg4[%c0_6, %c0_7] : memref<256x128xbf16, #tpu.memory_space<vmem>>, vector<256x128xbf16>
    %cst_8 = arith.constant dense<0.000000e+00> : vector<2x128xf32>
    %10 = tpu.matmul %8, %9, %cst_8 {dimension_numbers = #tpu.dot_dimension_numbers<[1], [0], [0], [1], [0, 0, 1, 1], [], []>} : vector<2x256xbf16>, vector<256x128xbf16>, vector<2x128xf32> -> vector<2x128xf32>
    %c0_9 = arith.constant 0 : index
    %c0_10 = arith.constant 0 : index
    %11 = vector.load %arg5[%c0_9, %c0_10] : memref<1x128xf32, #tpu.memory_space<vmem>>, vector<1x128xf32>
    %12 = vector.broadcast %11 : vector<1x128xf32> to vector<2x128xf32>
    %13 = arith.addf %10, %12 : vector<2x128xf32>
    %c0_11 = arith.constant 0 : index
    %c0_12 = arith.constant 0 : index
    %14 = vector.load %arg6[%c0_11, %c0_12] : memref<256x128xbf16, #tpu.memory_space<vmem>>, vector<256x128xbf16>
    %cst_13 = arith.constant dense<0.000000e+00> : vector<2x128xf32>
    %15 = tpu.matmul %8, %14, %cst_13 {dimension_numbers = #tpu.dot_dimension_numbers<[1], [0], [0], [1], [0, 0, 1, 1], [], []>} : vector<2x256xbf16>, vector<256x128xbf16>, vector<2x128xf32> -> vector<2x128xf32>
    %c0_14 = arith.constant 0 : index
    %c0_15 = arith.constant 0 : index
    %16 = vector.load %arg7[%c0_14, %c0_15] : memref<1x128xf32, #tpu.memory_space<vmem>>, vector<1x128xf32>
    %17 = vector.broadcast %16 : vector<1x128xf32> to vector<2x128xf32>
    %18 = arith.addf %15, %17 : vector<2x128xf32>
    %c0_16 = arith.constant 0 : index
    %c0_17 = arith.constant 0 : index
    %19 = vector.load %arg8[%c0_16, %c0_17] : memref<2x128xf32, #tpu.memory_space<vmem>>, vector<2x128xf32>
    tpu.vector_store %arg8[%c0_16, %c0_17], %13 {strides = array<i32>} : memref<2x128xf32, #tpu.memory_space<vmem>>, vector<2x128xf32>,
    %c0_18 = arith.constant 0 : index
    %c0_19 = arith.constant 0 : index
    %20 = vector.load %arg9[%c0_18, %c0_19] : memref<2x128xf32, #tpu.memory_space<vmem>>, vector<2x128xf32>
    tpu.vector_store %arg9[%c0_18, %c0_19], %18 {strides = array<i32>} : memref<2x128xf32, #tpu.memory_space<vmem>>, vector<2x128xf32>,
    return
  }
  func.func @transform_0(%arg0: i32) -> (i32, i32) {
    %c0_i32 = arith.constant 0 : i32
    %c0_i32_0 = arith.constant 0 : i32
    return %arg0, %c0_i32 : i32, i32
  }
  func.func @transform_1(%arg0: i32) -> (i32, i32) {
    %c0_i32 = arith.constant 0 : i32
    %c0_i32_0 = arith.constant 0 : i32
    %c0_i32_1 = arith.constant 0 : i32
    return %c0_i32, %c0_i32_0 : i32, i32
  }
  func.func @transform_2(%arg0: i32) -> (i32, i32) {
    %c0_i32 = arith.constant 0 : i32
    %c0_i32_0 = arith.constant 0 : i32
    %c0_i32_1 = arith.constant 0 : i32
    return %c0_i32, %c0_i32_0 : i32, i32
  }
  func.func @transform_3(%arg0: i32) -> (i32, i32) {
    %c0_i32 = arith.constant 0 : i32
    %c0_i32_0 = arith.constant 0 : i32
    %c0_i32_1 = arith.constant 0 : i32
    return %c0_i32, %c0_i32_0 : i32, i32
  }
  func.func @transform_4(%arg0: i32) -> (i32, i32) {
    %c0_i32 = arith.constant 0 : i32
    %c0_i32_0 = arith.constant 0 : i32
    %c0_i32_1 = arith.constant 0 : i32
    return %c0_i32, %c0_i32_0 : i32, i32
  }
  func.func @transform_5(%arg0: i32) -> (i32, i32) {
    %c0_i32 = arith.constant 0 : i32
    %c0_i32_0 = arith.constant 0 : i32
    %c0_i32_1 = arith.constant 0 : i32
    return %c0_i32, %c0_i32_0 : i32, i32
  }
  func.func @transform_6(%arg0: i32) -> (i32, i32) {
    %c0_i32 = arith.constant 0 : i32
    %c0_i32_0 = arith.constant 0 : i32
    %c0_i32_1 = arith.constant 0 : i32
    return %c0_i32, %c0_i32_0 : i32, i32
  }
  func.func @transform_7(%arg0: i32) -> (i32, i32) {
    %c0_i32 = arith.constant 0 : i32
    %c0_i32_0 = arith.constant 0 : i32
    return %arg0, %c0_i32 : i32, i32
  }
  func.func @transform_8(%arg0: i32) -> (i32, i32) {
    %c0_i32 = arith.constant 0 : i32
    %c0_i32_0 = arith.constant 0 : i32
    return %arg0, %c0_i32 : i32, i32
  }
}

</mosaic_0001>

<llo_original>
// kernel: tpu_custom_call.1
$region0: #{tpu_custom_call.1}
  #allocation0 [shape = 'u32[]', space=smem, size = 0x4, offset = 0x4, fixed_abs, tag = 'smem constant byte address 0x4 - core index']
  #allocation1 [shape = 'u32[144,128]{1,0:T(1,128)}', space=vmem, size = 0x12000, scoped, tag = 'internal scratch']
  %s0 = inlined_call_operand.hbm [shape: bf16[2,784], index: 0, kind: input, shape index: {}]
  %s1 = inlined_call_operand.hbm [shape: bf16[784,256], index: 1, kind: input, shape index: {}]
  %s2 = inlined_call_operand.vmem [shape: f32[1,256], index: 2, kind: input, shape index: {}]
  %s3 = inlined_call_operand.hbm [shape: bf16[256,128], index: 3, kind: input, shape index: {}]
  %s4 = inlined_call_operand.vmem [shape: f32[1,128], index: 4, kind: input, shape index: {}]
  %s5 = inlined_call_operand.hbm [shape: bf16[256,128], index: 5, kind: input, shape index: {}]
  %s6 = inlined_call_operand.vmem [shape: f32[1,128], index: 6, kind: input, shape index: {}]
  %s7 = inlined_call_operand.hbm [shape: f32[2,128], index: 7, kind: output, shape index: {0}]
  %s8 = inlined_call_operand.hbm [shape: f32[2,128], index: 8, kind: output, shape index: {1}]
  %9 = xla_tuple %s7, %s8
  %s10 = sld [smem:[#allocation0]]
  $region62: #{tpu_custom_call.1} parent=0
    _
  %s12 = ssub.s32 1, %s10
  %s13 = scalar_select 0, %s12, %s10
  $region1: #{tpu_custom_call.1} parent=0
    #allocation2 [shape = 'u8[3584]{0}', space=vmem, size = 0x1000, scoped, tag = 'input window, operand 0, single buffered']
    #allocation3 [shape = 's32[1]{0}', space=sflag, size = 0x4, scoped, tag = 'scoped memory for tpu_custom_call.1']
    #allocation4 [shape = 's32[1]{0}', space=sflag, size = 0x4, scoped, tag = 'scoped memory for tpu_custom_call.1']
    #allocation5 [shape = 'u8[401408]{0}', space=vmem, size = 0x62000, scoped, tag = 'input window, operand 1, single buffered']
    #allocation6 [shape = 's32[1]{0}', space=sflag, size = 0x4, scoped, tag = 'scoped memory for tpu_custom_call.1']
    #allocation7 [shape = 'u8[65536]{0}', space=vmem, size = 0x10000, scoped, tag = 'input window, operand 3, single buffered']
    #allocation8 [shape = 'u8[65536]{0}', space=vmem, size = 0x10000, scoped, tag = 'input window, operand 5, single buffered']
    #allocation9 [shape = 's32[1]{0}', space=sflag, size = 0x4, scoped, tag = 'scoped memory for tpu_custom_call.1']
    #allocation10 [shape = 'u8[1024]{0}', space=vmem, size = 0x400, scoped, tag = 'output window, operand 0, single buffered']
    #allocation11 [shape = 'u8[1024]{0}', space=vmem, size = 0x400, scoped, tag = 'output window, operand 1, single buffered']
    #allocation12 [shape = 's32[1]{0}', space=sflag, size = 0x4, scoped, tag = 'scoped memory for tpu_custom_call.1']
    %14 = vsyncpa [#allocation3], 0
    %15 = vsyncpa [#allocation6], 0
    %16 = vsyncpa [#allocation9], 0
    %17 = vsyncpa [#allocation4], 0
    %18 = vsyncpa [#allocation12], 0
    // Predicated region
    $region2: #{tpu_custom_call.1} parent=1 // pred_check
      _
    $region3: #{tpu_custom_call.1} parent=1 // pred_check_branch
      %20 = sbr.rel (0) target = $region5
    $region4: #{tpu_custom_call.1} parent=1 // pred_region
      %s22 = ssub.s32 112, 112
      %23 = vsyncadd [#allocation3], %s22
      %s25 = sshll.u32 [#allocation2], 4
      %s26 = int_to_ptr.vmem [resolvable:$true] %s25
      %28 = dma.hbm_to_vmem [thread:$0]  %s0, 112, %s26, [#allocation3]
    $region5: #{tpu_custom_call.1} parent=1 // pred_fallthru
      _
    // Predicated region
    $region6: #{tpu_custom_call.1} parent=1 // pred_check
      _
    $region7: #{tpu_custom_call.1} parent=1 // pred_check_branch
      %30 = sbr.rel (0) target = $region9
    $region8: #{tpu_custom_call.1} parent=1 // pred_region
      %s32 = ssub.s32 12544, 12544
      %33 = vsyncadd [#allocation6], %s32
      %s34 = sshll.u32 [#allocation5], 4
      %s35 = int_to_ptr.vmem [resolvable:$true] %s34
      %40 = dma.hbm_to_vmem [thread:$0]  %s1, 12544, %s35, [#allocation6], 128, 128, 8
    $region9: #{tpu_custom_call.1} parent=1 // pred_fallthru
      _
    // Predicated region
    $region10: #{tpu_custom_call.1} parent=1 // pred_check
      _
    $region11: #{tpu_custom_call.1} parent=1 // pred_check_branch
      %42 = sbr.rel (0) target = $region13
    $region12: #{tpu_custom_call.1} parent=1 // pred_region
      _
    $region13: #{tpu_custom_call.1} parent=1 // pred_fallthru
      _
    // Predicated region
    $region14: #{tpu_custom_call.1} parent=1 // pred_check
      _
    $region15: #{tpu_custom_call.1} parent=1 // pred_check_branch
      %44 = sbr.rel (0) target = $region17
    $region16: #{tpu_custom_call.1} parent=1 // pred_region
      %s46 = ssub.s32 2048, 2048
      %47 = vsyncadd [#allocation6], %s46
      %s48 = sshll.u32 [#allocation7], 4
      %s49 = int_to_ptr.vmem [resolvable:$true] %s48
      %54 = dma.hbm_to_vmem [thread:$0]  %s3, 2048, %s49, [#allocation6], 64, 64, 4
    $region17: #{tpu_custom_call.1} parent=1 // pred_fallthru
      _
    // Predicated region
    $region18: #{tpu_custom_call.1} parent=1 // pred_check
      _
    $region19: #{tpu_custom_call.1} parent=1 // pred_check_branch
      %56 = sbr.rel (0) target = $region21
    $region20: #{tpu_custom_call.1} parent=1 // pred_region
      _
    $region21: #{tpu_custom_call.1} parent=1 // pred_fallthru
      _
    // Predicated region
    $region22: #{tpu_custom_call.1} parent=1 // pred_check
      _
    $region23: #{tpu_custom_call.1} parent=1 // pred_check_branch
      %58 = sbr.rel (0) target = $region25
    $region24: #{tpu_custom_call.1} parent=1 // pred_region
      %s60 = ssub.s32 2048, 2048
      %61 = vsyncadd [#allocation9], %s60
      %s62 = sshll.u32 [#allocation8], 4
      %s63 = int_to_ptr.vmem [resolvable:$true] %s62
      %68 = dma.hbm_to_vmem [thread:$0]  %s5, 2048, %s63, [#allocation9], 64, 64, 4
    $region25: #{tpu_custom_call.1} parent=1 // pred_fallthru
      _
    // Predicated region
    $region26: #{tpu_custom_call.1} parent=1 // pred_check
      _
    $region27: #{tpu_custom_call.1} parent=1 // pred_check_branch
      %70 = sbr.rel (0) target = $region29
    $region28: #{tpu_custom_call.1} parent=1 // pred_region
      _
    $region29: #{tpu_custom_call.1} parent=1 // pred_fallthru
      _
    // Predicated region
    $region30: #{tpu_custom_call.1} parent=1 // pred_check
      _
    $region31: #{tpu_custom_call.1} parent=1 // pred_check_branch
      %72 = sbr.rel (0) target = $region33
    $region32: #{tpu_custom_call.1} parent=1 // pred_region
      %73 = dma.done [#allocation3], 112
    $region33: #{tpu_custom_call.1} parent=1 // pred_fallthru
      _
    // Predicated region
    $region34: #{tpu_custom_call.1} parent=1 // pred_check
      _
    $region35: #{tpu_custom_call.1} parent=1 // pred_check_branch
      %75 = sbr.rel (0) target = $region37
    $region36: #{tpu_custom_call.1} parent=1 // pred_region
      %76 = dma.done [#allocation6], 12544
    $region37: #{tpu_custom_call.1} parent=1 // pred_fallthru
      _
    // Predicated region
    $region38: #{tpu_custom_call.1} parent=1 // pred_check
      _
    $region39: #{tpu_custom_call.1} parent=1 // pred_check_branch
      %78 = sbr.rel (0) target = $region41
    $region40: #{tpu_custom_call.1} parent=1 // pred_region
      %79 = dma.done [#allocation6], 2048
    $region41: #{tpu_custom_call.1} parent=1 // pred_fallthru
      _
    // Predicated region
    $region42: #{tpu_custom_call.1} parent=1 // pred_check
      _
    $region43: #{tpu_custom_call.1} parent=1 // pred_check_branch
      %81 = sbr.rel (0) target = $region45
    $region44: #{tpu_custom_call.1} parent=1 // pred_region
      %82 = dma.done [#allocation9], 2048
    $region45: #{tpu_custom_call.1} parent=1 // pred_fallthru
      _
    %v84 = vld [vmem:[#allocation2] sm:$0x7f]
    %v85 = vld [vmem:[#allocation5] sm:$0xff]
    %v86 = vld [vmem:[#allocation5 + $0x8] sm:$0xff]
    %v87 = vld [vmem:[#allocation5 + $0x10] sm:$0xff]
    %v88 = vld [vmem:[#allocation5 + $0x18] sm:$0xff]
    %v89 = vld [vmem:[#allocation5 + $0x20] sm:$0xff]
    %v90 = vld [vmem:[#allocation5 + $0x28] sm:$0xff]
    %v91 = vld [vmem:[#allocation5 + $0x30] sm:$0xff]
    %v92 = vld [vmem:[#allocation5 + $0x38] sm:$0xff]
    %v93 = vld [vmem:[#allocation5 + $0x40] sm:$0xff]
    %v94 = vld [vmem:[#allocation5 + $0x48] sm:$0xff]
    %v95 = vld [vmem:[#allocation5 + $0x50] sm:$0xff]
    %v96 = vld [vmem:[#allocation5 + $0x58] sm:$0xff]
    %v97 = vld [vmem:[#allocation5 + $0x60] sm:$0xff]
    %v98 = vld [vmem:[#allocation5 + $0x68] sm:$0xff]
    %v99 = vld [vmem:[#allocation5 + $0x70] sm:$0xff]
    %v100 = vld [vmem:[#allocation5 + $0x78] sm:$0xff]
    %v101 = vld [vmem:[#allocation5 + $0x80] sm:$0xff]
    %v102 = vld [vmem:[#allocation5 + $0x88] sm:$0xff]
    %v103 = vld [vmem:[#allocation5 + $0x90] sm:$0xff]
    %v104 = vld [vmem:[#allocation5 + $0x98] sm:$0xff]
    %v105 = vld [vmem:[#allocation5 + $0xa0] sm:$0xff]
    %v106 = vld [vmem:[#allocation5 + $0xa8] sm:$0xff]
    %v107 = vld [vmem:[#allocation5 + $0xb0] sm:$0xff]
    %v108 = vld [vmem:[#allocation5 + $0xb8] sm:$0xff]
    %v109 = vld [vmem:[#allocation5 + $0xc0] sm:$0xff]
    %v110 = vld [vmem:[#allocation5 + $0xc8] sm:$0xff]
    %v111 = vld [vmem:[#allocation5 + $0xd0] sm:$0xff]
    %v112 = vld [vmem:[#allocation5 + $0xd8] sm:$0xff]
    %v113 = vld [vmem:[#allocation5 + $0xe0] sm:$0xff]
    %v114 = vld [vmem:[#allocation5 + $0xe8] sm:$0xff]
    %v115 = vld [vmem:[#allocation5 + $0xf0] sm:$0xff]
    %v116 = vld [vmem:[#allocation5 + $0xf8] sm:$0xff]
    %v117 = vld [vmem:[#allocation5 + $0x100] sm:$0xff]
    %v118 = vld [vmem:[#allocation5 + $0x108] sm:$0xff]
    %v119 = vld [vmem:[#allocation5 + $0x110] sm:$0xff]
    %v120 = vld [vmem:[#allocation5 + $0x118] sm:$0xff]
    %v121 = vld [vmem:[#allocation5 + $0x120] sm:$0xff]
    %v122 = vld [vmem:[#allocation5 + $0x128] sm:$0xff]
    %v123 = vld [vmem:[#allocation5 + $0x130] sm:$0xff]
    %v124 = vld [vmem:[#allocation5 + $0x138] sm:$0xff]
    %v125 = vld [vmem:[#allocation5 + $0x140] sm:$0xff]
    %v126 = vld [vmem:[#allocation5 + $0x148] sm:$0xff]
    %v127 = vld [vmem:[#allocation5 + $0x150] sm:$0xff]
    %v128 = vld [vmem:[#allocation5 + $0x158] sm:$0xff]
    %v129 = vld [vmem:[#allocation5 + $0x160] sm:$0xff]
    %v130 = vld [vmem:[#allocation5 + $0x168] sm:$0xff]
    %v131 = vld [vmem:[#allocation5 + $0x170] sm:$0xff]
    %v132 = vld [vmem:[#allocation5 + $0x178] sm:$0xff]
    %v133 = vld [vmem:[#allocation5 + $0x180] sm:$0xff]
    %v134 = vld [vmem:[#allocation5 + $0x188] sm:$0xff]
    %v135 = vld [vmem:[#allocation5 + $0x190] sm:$0xff]
    %v136 = vld [vmem:[#allocation5 + $0x198] sm:$0xff]
    %v137 = vld [vmem:[#allocation5 + $0x1a0] sm:$0xff]
    %v138 = vld [vmem:[#allocation5 + $0x1a8] sm:$0xff]
    %v139 = vld [vmem:[#allocation5 + $0x1b0] sm:$0xff]
    %v140 = vld [vmem:[#allocation5 + $0x1b8] sm:$0xff]
    %v141 = vld [vmem:[#allocation5 + $0x1c0] sm:$0xff]
    %v142 = vld [vmem:[#allocation5 + $0x1c8] sm:$0xff]
    %v143 = vld [vmem:[#allocation5 + $0x1d0] sm:$0xff]
    %v144 = vld [vmem:[#allocation5 + $0x1d8] sm:$0xff]
    %v145 = vld [vmem:[#allocation5 + $0x1e0] sm:$0xff]
    %v146 = vld [vmem:[#allocation5 + $0x1e8] sm:$0xff]
    %v147 = vld [vmem:[#allocation5 + $0x1f0] sm:$0xff]
    %v148 = vld [vmem:[#allocation5 + $0x1f8] sm:$0xff]
    %v149 = vld [vmem:[#allocation5 + $0x200] sm:$0xff]
    %v150 = vld [vmem:[#allocation5 + $0x208] sm:$0xff]
    %v151 = vld [vmem:[#allocation5 + $0x210] sm:$0xff]
    %v152 = vld [vmem:[#allocation5 + $0x218] sm:$0xff]
    %v153 = vld [vmem:[#allocation5 + $0x220] sm:$0xff]
    %v154 = vld [vmem:[#allocation5 + $0x228] sm:$0xff]
    %v155 = vld [vmem:[#allocation5 + $0x230] sm:$0xff]
    %v156 = vld [vmem:[#allocation5 + $0x238] sm:$0xff]
    %v157 = vld [vmem:[#allocation5 + $0x240] sm:$0xff]
    %v158 = vld [vmem:[#allocation5 + $0x248] sm:$0xff]
    %v159 = vld [vmem:[#allocation5 + $0x250] sm:$0xff]
    %v160 = vld [vmem:[#allocation5 + $0x258] sm:$0xff]
    %v161 = vld [vmem:[#allocation5 + $0x260] sm:$0xff]
    %v162 = vld [vmem:[#allocation5 + $0x268] sm:$0xff]
    %v163 = vld [vmem:[#allocation5 + $0x270] sm:$0xff]
    %v164 = vld [vmem:[#allocation5 + $0x278] sm:$0xff]
    %v165 = vld [vmem:[#allocation5 + $0x280] sm:$0xff]
    %v166 = vld [vmem:[#allocation5 + $0x288] sm:$0xff]
    %v167 = vld [vmem:[#allocation5 + $0x290] sm:$0xff]
    %v168 = vld [vmem:[#allocation5 + $0x298] sm:$0xff]
    %v169 = vld [vmem:[#allocation5 + $0x2a0] sm:$0xff]
    %v170 = vld [vmem:[#allocation5 + $0x2a8] sm:$0xff]
    %v171 = vld [vmem:[#allocation5 + $0x2b0] sm:$0xff]
    %v172 = vld [vmem:[#allocation5 + $0x2b8] sm:$0xff]
    %v173 = vld [vmem:[#allocation5 + $0x2c0] sm:$0xff]
    %v174 = vld [vmem:[#allocation5 + $0x2c8] sm:$0xff]
    %v175 = vld [vmem:[#allocation5 + $0x2d0] sm:$0xff]
    %v176 = vld [vmem:[#allocation5 + $0x2d8] sm:$0xff]
    %v177 = vld [vmem:[#allocation5 + $0x2e0] sm:$0xff]
    %v178 = vld [vmem:[#allocation5 + $0x2e8] sm:$0xff]
    %v179 = vld [vmem:[#allocation5 + $0x2f0] sm:$0xff]
    %v180 = vld [vmem:[#allocation5 + $0x2f8] sm:$0xff]
    %v181 = vld [vmem:[#allocation5 + $0x300] sm:$0xff]
    %v182 = vld [vmem:[#allocation5 + $0x308] sm:$0xff]
    %v183 = vld [vmem:[%s2] sm:$0x3]
    %v185 = vlaneseq
    %v186 = vshrl.u32 %v185, 7
    %v187 = vsub.s32 0, %v186
    %v188 = vrot.slane %v183, %v187
    %v189 = vlaneseq
    %v190 = vshrl.u32 %v189, 7
    %v191 = vsub.s32 1, %v190
    %v192 = vrot.slane %v183, %v191
    %v196 = vcombine.high %v84, %v84
    %v198 = vunpack.c.l.s4 1966171168
    %v199 = vunpack.c.0.s8 %v198
    %v200 = vlaneseq
    %v201 = vshrl.u32 %v200, 7
    %v202 = vsub.s32 %v199, %v201
    %v203 = vrot.slane %v84, %v202
    %v205 = vunpack.c.l.s4 1966171168
    %v206 = vunpack.c.0.s8 %v205
    %v207 = vlaneseq
    %v208 = vshrl.u32 %v207, 7
    %v209 = vsub.s32 %v206, %v208
    %v210 = vrot.slane %v196, %v209
    %v211 = vcombine.high %v203, %v203
    %v212 = vcombine.high %v210, %v210
    %v214 = vunpack.c.l.s4 1966171168
    %v215 = vunpack.c.0.s8 %v214
    %v216 = vlaneseq
    %v217 = vshrl.u32 %v216, 7
    %v218 = vsub.s32 %v215, %v217
    %v219 = vrot.slane %v203, %v218
    %v221 = vunpack.c.l.s4 1966171168
    %v222 = vunpack.c.0.s8 %v221
    %v223 = vlaneseq
    %v224 = vshrl.u32 %v223, 7
    %v225 = vsub.s32 %v222, %v224
    %v226 = vrot.slane %v210, %v225
    %v228 = vunpack.c.l.s4 1966171168
    %v229 = vunpack.c.0.s8 %v228
    %v230 = vlaneseq
    %v231 = vshrl.u32 %v230, 7
    %v232 = vsub.s32 %v229, %v231
    %v233 = vrot.slane %v211, %v232
    %v235 = vunpack.c.l.s4 1966171168
    %v236 = vunpack.c.0.s8 %v235
    %v237 = vlaneseq
    %v238 = vshrl.u32 %v237, 7
    %v239 = vsub.s32 %v236, %v238
    %v240 = vrot.slane %v212, %v239
    %v241 = vcombine.high %v219, %v219
    %v242 = vcombine.high %v226, %v226
    %v243 = vcombine.high %v233, %v233
    %v348 = vunpack.c.l.b16 %v85
    %v349 = vunpack.c.h.b16 %v85
    %v350 = vunpack.c.l.b16 %v86
    %v351 = vunpack.c.h.b16 %v86
    %v352 = vunpack.c.l.b16 %v87
    %v353 = vunpack.c.h.b16 %v87
    %v354 = vunpack.c.l.b16 %v88
    %v355 = vunpack.c.h.b16 %v88
    %v356 = vunpack.c.l.b16 %v89
    %v357 = vunpack.c.h.b16 %v89
    %v358 = vunpack.c.l.b16 %v90
    %v359 = vunpack.c.h.b16 %v90
    %v360 = vunpack.c.l.b16 %v91
    %v361 = vunpack.c.h.b16 %v91
    %v362 = vunpack.c.l.b16 %v92
    %v363 = vunpack.c.h.b16 %v92
    %v364 = vunpack.c.l.b16 %v93
    %v365 = vunpack.c.h.b16 %v93
    %v366 = vunpack.c.l.b16 %v94
    %v367 = vunpack.c.h.b16 %v94
    %v368 = vunpack.c.l.b16 %v95
    %v369 = vunpack.c.h.b16 %v95
    %v370 = vunpack.c.l.b16 %v96
    %v371 = vunpack.c.h.b16 %v96
    %v372 = vunpack.c.l.b16 %v97
    %v373 = vunpack.c.h.b16 %v97
    %v374 = vunpack.c.l.b16 %v98
    %v375 = vunpack.c.h.b16 %v98
    %v376 = vunpack.c.l.b16 %v99
    %v377 = vunpack.c.h.b16 %v99
    %v378 = vunpack.c.l.b16 %v100
    %v379 = vunpack.c.h.b16 %v100
    %v380 = vunpack.c.l.b16 %v101
    %v381 = vunpack.c.h.b16 %v101
    %v382 = vunpack.c.l.b16 %v102
    %v383 = vunpack.c.h.b16 %v102
    %v384 = vunpack.c.l.b16 %v103
    %v385 = vunpack.c.h.b16 %v103
    %v386 = vunpack.c.l.b16 %v104
    %v387 = vunpack.c.h.b16 %v104
    %v388 = vunpack.c.l.b16 %v105
    %v389 = vunpack.c.h.b16 %v105
    %v390 = vunpack.c.l.b16 %v106
    %v391 = vunpack.c.h.b16 %v106
    %v392 = vunpack.c.l.b16 %v107
    %v393 = vunpack.c.h.b16 %v107
    %v394 = vunpack.c.l.b16 %v108
    %v395 = vunpack.c.h.b16 %v108
    %v396 = vunpack.c.l.b16 %v109
    %v397 = vunpack.c.h.b16 %v109
    %v398 = vunpack.c.l.b16 %v110
    %v399 = vunpack.c.h.b16 %v110
    %v400 = vunpack.c.l.b16 %v111
    %v401 = vunpack.c.h.b16 %v111
    %v402 = vunpack.c.l.b16 %v112
    %v403 = vunpack.c.h.b16 %v112
    %v404 = vunpack.c.l.b16 %v113
    %v405 = vunpack.c.h.b16 %v113
    %v406 = vunpack.c.l.b16 %v114
    %v407 = vunpack.c.h.b16 %v114
    %v408 = vunpack.c.l.b16 %v115
    %v409 = vunpack.c.h.b16 %v115
    %v410 = vunpack.c.l.b16 %v116
    %v411 = vunpack.c.h.b16 %v116
    %v412 = vunpack.c.l.b16 %v117
    %v413 = vunpack.c.h.b16 %v117
    %v414 = vunpack.c.l.b16 %v118
    %v415 = vunpack.c.h.b16 %v118
    %v416 = vunpack.c.l.b16 %v119
    %v417 = vunpack.c.h.b16 %v119
    %v418 = vunpack.c.l.b16 %v120
    %v419 = vunpack.c.h.b16 %v120
    %v420 = vunpack.c.l.b16 %v121
    %v421 = vunpack.c.h.b16 %v121
    %v422 = vunpack.c.l.b16 %v122
    %v423 = vunpack.c.h.b16 %v122
    %v424 = vunpack.c.l.b16 %v123
    %v425 = vunpack.c.h.b16 %v123
    %v426 = vunpack.c.l.b16 %v124
    %v427 = vunpack.c.h.b16 %v124
    %v428 = vunpack.c.l.b16 %v125
    %v429 = vunpack.c.h.b16 %v125
    %v430 = vunpack.c.l.b16 %v126
    %v431 = vunpack.c.h.b16 %v126
    %v432 = vunpack.c.l.b16 %v127
    %v433 = vunpack.c.h.b16 %v127
    %v434 = vunpack.c.l.b16 %v128
    %v435 = vunpack.c.h.b16 %v128
    %v436 = vunpack.c.l.b16 %v129
    %v437 = vunpack.c.h.b16 %v129
    %v438 = vunpack.c.l.b16 %v130
    %v439 = vunpack.c.h.b16 %v130
    %v440 = vunpack.c.l.b16 %v131
    %v441 = vunpack.c.h.b16 %v131
    %v442 = vunpack.c.l.b16 %v132
    %v443 = vunpack.c.h.b16 %v132
    %v444 = vunpack.c.l.b16 %v133
    %v445 = vunpack.c.h.b16 %v133
    %v446 = vunpack.c.l.b16 %v134
    %v447 = vunpack.c.h.b16 %v134
    %v448 = vunpack.c.l.b16 %v135
    %v449 = vunpack.c.h.b16 %v135
    %v450 = vunpack.c.l.b16 %v136
    %v451 = vunpack.c.h.b16 %v136
    %v452 = vunpack.c.l.b16 %v137
    %v453 = vunpack.c.h.b16 %v137
    %v454 = vunpack.c.l.b16 %v138
    %v455 = vunpack.c.h.b16 %v138
    %v456 = vunpack.c.l.b16 %v139
    %v457 = vunpack.c.h.b16 %v139
    %v458 = vunpack.c.l.b16 %v140
    %v459 = vunpack.c.h.b16 %v140
    %v460 = vunpack.c.l.b16 %v141
    %v461 = vunpack.c.h.b16 %v141
    %v462 = vunpack.c.l.b16 %v142
    %v463 = vunpack.c.h.b16 %v142
    %v464 = vunpack.c.l.b16 %v143
    %v465 = vunpack.c.h.b16 %v143
    %v466 = vunpack.c.l.b16 %v144
    %v467 = vunpack.c.h.b16 %v144
    %v468 = vunpack.c.l.b16 %v145
    %v469 = vunpack.c.h.b16 %v145
    %v470 = vunpack.c.l.b16 %v146
    %v471 = vunpack.c.h.b16 %v146
    %v472 = vunpack.c.l.b16 %v147
    %v473 = vunpack.c.h.b16 %v147
    %v474 = vunpack.c.l.b16 %v148
    %v475 = vunpack.c.h.b16 %v148
    %v476 = vunpack.c.l.b16 %v149
    %v477 = vunpack.c.h.b16 %v149
    %v478 = vunpack.c.l.b16 %v150
    %v479 = vunpack.c.h.b16 %v150
    %v480 = vunpack.c.l.b16 %v151
    %v481 = vunpack.c.h.b16 %v151
    %v482 = vunpack.c.l.b16 %v152
    %v483 = vunpack.c.h.b16 %v152
    %v484 = vunpack.c.l.b16 %v153
    %v485 = vunpack.c.h.b16 %v153
    %v486 = vunpack.c.l.b16 %v154
    %v487 = vunpack.c.h.b16 %v154
    %v488 = vunpack.c.l.b16 %v155
    %v489 = vunpack.c.h.b16 %v155
    %v490 = vunpack.c.l.b16 %v156
    %v491 = vunpack.c.h.b16 %v156
    %v492 = vunpack.c.l.b16 %v157
    %v493 = vunpack.c.h.b16 %v157
    %v494 = vunpack.c.l.b16 %v158
    %v495 = vunpack.c.h.b16 %v158
    %v496 = vunpack.c.l.b16 %v159
    %v497 = vunpack.c.h.b16 %v159
    %v498 = vunpack.c.l.b16 %v160
    %v499 = vunpack.c.h.b16 %v160
    %v500 = vunpack.c.l.b16 %v161
    %v501 = vunpack.c.h.b16 %v161
    %v502 = vunpack.c.l.b16 %v162
    %v503 = vunpack.c.h.b16 %v162
    %v504 = vunpack.c.l.b16 %v163
    %v505 = vunpack.c.h.b16 %v163
    %v506 = vunpack.c.l.b16 %v164
    %v507 = vunpack.c.h.b16 %v164
    %v508 = vunpack.c.l.b16 %v165
    %v509 = vunpack.c.h.b16 %v165
    %v510 = vunpack.c.l.b16 %v166
    %v511 = vunpack.c.h.b16 %v166
    %v512 = vunpack.c.l.b16 %v167
    %v513 = vunpack.c.h.b16 %v167
    %v514 = vunpack.c.l.b16 %v168
    %v515 = vunpack.c.h.b16 %v168
    %v516 = vunpack.c.l.b16 %v169
    %v517 = vunpack.c.h.b16 %v169
    %v518 = vunpack.c.l.b16 %v170
    %v519 = vunpack.c.h.b16 %v170
    %v520 = vunpack.c.l.b16 %v171
    %v521 = vunpack.c.h.b16 %v171
    %v522 = vunpack.c.l.b16 %v172
    %v523 = vunpack.c.h.b16 %v172
    %v524 = vunpack.c.l.b16 %v173
    %v525 = vunpack.c.h.b16 %v173
    %v526 = vunpack.c.l.b16 %v174
    %v527 = vunpack.c.h.b16 %v174
    %v528 = vunpack.c.l.b16 %v175
    %v529 = vunpack.c.h.b16 %v175
    %v530 = vunpack.c.l.b16 %v176
    %v531 = vunpack.c.h.b16 %v176
    %v532 = vunpack.c.l.b16 %v177
    %v533 = vunpack.c.h.b16 %v177
    %v534 = vunpack.c.l.b16 %v178
    %v535 = vunpack.c.h.b16 %v178
    %v536 = vunpack.c.l.b16 %v179
    %v537 = vunpack.c.h.b16 %v179
    %v538 = vunpack.c.l.b16 %v180
    %v539 = vunpack.c.h.b16 %v180
    %v540 = vunpack.c.l.b16 %v181
    %v541 = vunpack.c.h.b16 %v181
    %v542 = vunpack.c.l.b16 %v182
    %v543 = vunpack.c.h.b16 %v182
    %v544 = vpack.c.b16 %v350, %v348
    %v545 = vpack.c.b16 %v351, %v349
    %v546 = vpack.c.b16 %v354, %v352
    %v547 = vpack.c.b16 %v355, %v353
    %v548 = vpack.c.b16 %v358, %v356
    %v549 = vpack.c.b16 %v359, %v357
    %v550 = vpack.c.b16 %v362, %v360
    %v551 = vpack.c.b16 %v363, %v361
    %v552 = vpack.c.b16 %v366, %v364
    %v553 = vpack.c.b16 %v367, %v365
    %v554 = vpack.c.b16 %v370, %v368
    %v555 = vpack.c.b16 %v371, %v369
    %v556 = vpack.c.b16 %v374, %v372
    %v557 = vpack.c.b16 %v375, %v373
    %v558 = vpack.c.b16 %v378, %v376
    %v559 = vpack.c.b16 %v379, %v377
    %v560 = vpack.c.b16 %v382, %v380
    %v561 = vpack.c.b16 %v383, %v381
    %v562 = vpack.c.b16 %v386, %v384
    %v563 = vpack.c.b16 %v387, %v385
    %v564 = vpack.c.b16 %v390, %v388
    %v565 = vpack.c.b16 %v391, %v389
    %v566 = vpack.c.b16 %v394, %v392
    %v567 = vpack.c.b16 %v395, %v393
    %v568 = vpack.c.b16 %v398, %v396
    %v569 = vpack.c.b16 %v399, %v397
    %v570 = vpack.c.b16 %v402, %v400
    %v571 = vpack.c.b16 %v403, %v401
    %v572 = vpack.c.b16 %v406, %v404
    %v573 = vpack.c.b16 %v407, %v405
    %v574 = vpack.c.b16 %v410, %v408
    %v575 = vpack.c.b16 %v411, %v409
    %v576 = vpack.c.b16 %v414, %v412
    %v577 = vpack.c.b16 %v415, %v413
    %v578 = vpack.c.b16 %v418, %v416
    %v579 = vpack.c.b16 %v419, %v417
    %v580 = vpack.c.b16 %v422, %v420
    %v581 = vpack.c.b16 %v423, %v421
    %v582 = vpack.c.b16 %v426, %v424
    %v583 = vpack.c.b16 %v427, %v425
    %v584 = vpack.c.b16 %v430, %v428
    %v585 = vpack.c.b16 %v431, %v429
    %v586 = vpack.c.b16 %v434, %v432
    %v587 = vpack.c.b16 %v435, %v433
    %v588 = vpack.c.b16 %v438, %v436
    %v589 = vpack.c.b16 %v439, %v437
    %v590 = vpack.c.b16 %v442, %v440
    %v591 = vpack.c.b16 %v443, %v441
    %v592 = vpack.c.b16 %v446, %v444
    %v593 = vpack.c.b16 %v447, %v445
    %v594 = vpack.c.b16 %v450, %v448
    %v595 = vpack.c.b16 %v451, %v449
    %v596 = vpack.c.b16 %v454, %v452
    %v597 = vpack.c.b16 %v455, %v453
    %v598 = vpack.c.b16 %v458, %v456
    %v599 = vpack.c.b16 %v459, %v457
    %v600 = vpack.c.b16 %v462, %v460
    %v601 = vpack.c.b16 %v463, %v461
    %v602 = vpack.c.b16 %v466, %v464
    %v603 = vpack.c.b16 %v467, %v465
    %v604 = vpack.c.b16 %v470, %v468
    %v605 = vpack.c.b16 %v471, %v469
    %v606 = vpack.c.b16 %v474, %v472
    %v607 = vpack.c.b16 %v475, %v473
    %v608 = vpack.c.b16 %v478, %v476
    %v609 = vpack.c.b16 %v479, %v477
    %v610 = vpack.c.b16 %v482, %v480
    %v611 = vpack.c.b16 %v483, %v481
    %v612 = vpack.c.b16 %v486, %v484
    %v613 = vpack.c.b16 %v487, %v485
    %v614 = vpack.c.b16 %v490, %v488
    %v615 = vpack.c.b16 %v491, %v489
    %v616 = vpack.c.b16 %v494, %v492
    %v617 = vpack.c.b16 %v495, %v493
    %v618 = vpack.c.b16 %v498, %v496
    %v619 = vpack.c.b16 %v499, %v497
    %v620 = vpack.c.b16 %v502, %v500
    %v621 = vpack.c.b16 %v503, %v501
    %v622 = vpack.c.b16 %v506, %v504
    %v623 = vpack.c.b16 %v507, %v505
    %v624 = vpack.c.b16 %v510, %v508
    %v625 = vpack.c.b16 %v511, %v509
    %v626 = vpack.c.b16 %v514, %v512
    %v627 = vpack.c.b16 %v515, %v513
    %v628 = vpack.c.b16 %v518, %v516
    %v629 = vpack.c.b16 %v519, %v517
    %v630 = vpack.c.b16 %v522, %v520
    %v631 = vpack.c.b16 %v523, %v521
    %v632 = vpack.c.b16 %v526, %v524
    %v633 = vpack.c.b16 %v527, %v525
    %v634 = vpack.c.b16 %v530, %v528
    %v635 = vpack.c.b16 %v531, %v529
    %v636 = vpack.c.b16 %v534, %v532
    %v637 = vpack.c.b16 %v535, %v533
    %v638 = vpack.c.b16 %v538, %v536
    %v639 = vpack.c.b16 %v539, %v537
    %v640 = vpack.c.b16 %v542, %v540
    %v641 = vpack.c.b16 %v543, %v541
    %vm740 = vcmask 130048
    %v742 = vsel %vm740, %v242, 0
    %744 = vmatprep.subr.bf16.mxu0 %v559
    %745 = vmatpush1.bf16.msra.mxu0 %v558
    %746 = vmatprep.subr.bf16.mxu0 %v557
    %747 = vmatpush1.bf16.msra.mxu0 %v556
    %748 = vmatprep.subr.bf16.mxu0 %v555
    %749 = vmatpush1.bf16.msra.mxu0 %v554
    %750 = vmatprep.subr.bf16.mxu0 %v553
    %751 = vmatpush1.bf16.msra.mxu0 %v552
    %752 = vmatprep.subr.bf16.mxu0 %v551
    %753 = vmatpush1.bf16.msra.mxu0 %v550
    %754 = vmatprep.subr.bf16.mxu0 %v549
    %755 = vmatpush1.bf16.msra.mxu0 %v548
    %756 = vmatprep.subr.bf16.mxu0 %v547
    %757 = vmatpush1.bf16.msra.mxu0 %v546
    %758 = vmatprep.subr.bf16.mxu0 %v545
    %759 = vmatpush1.bf16.msra.mxu0 %v544
    %760 = vmatprep.subr.bf16.mxu0 %v575
    %761 = vmatpush2.bf16.msra.mxu0 %v574
    %762 = vmatprep.subr.bf16.mxu0 %v573
    %763 = vmatpush2.bf16.msra.mxu0 %v572
    %764 = vmatprep.subr.bf16.mxu0 %v571
    %765 = vmatpush2.bf16.msra.mxu0 %v570
    %766 = vmatprep.subr.bf16.mxu0 %v569
    %767 = vmatpush2.bf16.msra.mxu0 %v568
    %768 = vmatprep.subr.bf16.mxu0 %v567
    %769 = vmatpush2.bf16.msra.mxu0 %v566
    %770 = vmatprep.subr.bf16.mxu0 %v565
    %771 = vmatpush2.bf16.msra.mxu0 %v564
    %772 = vmatprep.subr.bf16.mxu0 %v563
    %773 = vmatpush2.bf16.msra.mxu0 %v562
    %774 = vmatprep.subr.bf16.mxu0 %v561
    %775 = vmatpush2.bf16.msra.mxu0 %v560
    %776 = vmatprep.mubr.bf16.mxu0 %v233
    %777 = vmatmul.mubr.bf16.gmra.mxu0 %v219
    %v778 = vpop.f32.mrf.mxu0
    %v779 = vadd.f32 %v188, %v778
    %v780 = vpop.f32.mrf.mxu0
    %v781 = vadd.f32 %v192, %v780
    %v782 = vpop.f32.mrf.mxu0
    %v783 = vpop.f32.mrf.mxu0
    %784 = vdwg.mxu0
    %785 = vmatprep.subr.bf16.mxu0 %v591
    %786 = vmatpush1.bf16.msra.mxu0 %v590
    %787 = vmatprep.subr.bf16.mxu0 %v589
    %788 = vmatpush1.bf16.msra.mxu0 %v588
    %789 = vmatprep.subr.bf16.mxu0 %v587
    %790 = vmatpush1.bf16.msra.mxu0 %v586
    %791 = vmatprep.subr.bf16.mxu0 %v585
    %792 = vmatpush1.bf16.msra.mxu0 %v584
    %793 = vmatprep.subr.bf16.mxu0 %v583
    %794 = vmatpush1.bf16.msra.mxu0 %v582
    %795 = vmatprep.subr.bf16.mxu0 %v581
    %796 = vmatpush1.bf16.msra.mxu0 %v580
    %797 = vmatprep.subr.bf16.mxu0 %v579
    %798 = vmatpush1.bf16.msra.mxu0 %v578
    %799 = vmatprep.subr.bf16.mxu0 %v577
    %800 = vmatpush1.bf16.msra.mxu0 %v576
    %801 = vmatprep.subr.bf16.mxu0 %v607
    %802 = vmatpush2.bf16.msra.mxu0 %v606
    %803 = vmatprep.subr.bf16.mxu0 %v605
    %804 = vmatpush2.bf16.msra.mxu0 %v604
    %805 = vmatprep.subr.bf16.mxu0 %v603
    %806 = vmatpush2.bf16.msra.mxu0 %v602
    %807 = vmatprep.subr.bf16.mxu0 %v601
    %808 = vmatpush2.bf16.msra.mxu0 %v600
    %809 = vmatprep.subr.bf16.mxu0 %v599
    %810 = vmatpush2.bf16.msra.mxu0 %v598
    %811 = vmatprep.subr.bf16.mxu0 %v597
    %812 = vmatpush2.bf16.msra.mxu0 %v596
    %813 = vmatprep.subr.bf16.mxu0 %v595
    %814 = vmatpush2.bf16.msra.mxu0 %v594
    %815 = vmatprep.subr.bf16.mxu0 %v593
    %816 = vmatpush2.bf16.msra.mxu0 %v592
    %817 = vmatprep.mubr.bf16.mxu0 %v243
    %818 = vmatmul.mubr.bf16.gmra.mxu0 %v241
    %v819 = vpop.f32.mrf.mxu0
    %v820 = vadd.f32 %v779, %v819
    %v821 = vpop.f32.mrf.mxu0
    %v822 = vadd.f32 %v781, %v821
    %v823 = vpop.f32.mrf.mxu0
    %v824 = vpop.f32.mrf.mxu0
    %825 = vdwg.mxu0
    %826 = vmatprep.subr.bf16.mxu0 %v623
    %827 = vmatpush1.bf16.msra.mxu0 %v622
    %828 = vmatprep.subr.bf16.mxu0 %v621
    %829 = vmatpush1.bf16.msra.mxu0 %v620
    %830 = vmatprep.subr.bf16.mxu0 %v619
    %831 = vmatpush1.bf16.msra.mxu0 %v618
    %832 = vmatprep.subr.bf16.mxu0 %v617
    %833 = vmatpush1.bf16.msra.mxu0 %v616
    %834 = vmatprep.subr.bf16.mxu0 %v615
    %835 = vmatpush1.bf16.msra.mxu0 %v614
    %836 = vmatprep.subr.bf16.mxu0 %v613
    %837 = vmatpush1.bf16.msra.mxu0 %v612
    %838 = vmatprep.subr.bf16.mxu0 %v611
    %839 = vmatpush1.bf16.msra.mxu0 %v610
    %840 = vmatprep.subr.bf16.mxu0 %v609
    %841 = vmatpush1.bf16.msra.mxu0 %v608
    %842 = vmatprep.subr.bf16.mxu0 %v639
    %843 = vmatpush2.bf16.msra.mxu0 %v638
    %844 = vmatprep.subr.bf16.mxu0 %v637
    %845 = vmatpush2.bf16.msra.mxu0 %v636
    %846 = vmatprep.subr.bf16.mxu0 %v635
    %847 = vmatpush2.bf16.msra.mxu0 %v634
    %848 = vmatprep.subr.bf16.mxu0 %v633
    %849 = vmatpush2.bf16.msra.mxu0 %v632
    %850 = vmatprep.subr.bf16.mxu0 %v631
    %851 = vmatpush2.bf16.msra.mxu0 %v630
    %852 = vmatprep.subr.bf16.mxu0 %v629
    %853 = vmatpush2.bf16.msra.mxu0 %v628
    %854 = vmatprep.subr.bf16.mxu0 %v627
    %855 = vmatpush2.bf16.msra.mxu0 %v626
    %856 = vmatprep.subr.bf16.mxu0 %v625
    %857 = vmatpush2.bf16.msra.mxu0 %v624
    %858 = vmatprep.mubr.bf16.mxu0 %v240
    %859 = vmatmul.mubr.bf16.gmra.mxu0 %v226
    %v860 = vpop.f32.mrf.mxu0
    %v861 = vadd.f32 %v820, %v860
    %v862 = vpop.f32.mrf.mxu0
    %v863 = vadd.f32 %v822, %v862
    %v864 = vpop.f32.mrf.mxu0
    %v865 = vpop.f32.mrf.mxu0
    %866 = vdwg.mxu0
    %867 = vmatprep.subr.bf16.mxu0 0
    %868 = vmatpush1.bf16.msra.mxu0 0
    %869 = vmatprep.subr.bf16.mxu0 0
    %870 = vmatpush1.bf16.msra.mxu0 0
    %871 = vmatprep.subr.bf16.mxu0 0
    %872 = vmatpush1.bf16.msra.mxu0 0
    %873 = vmatprep.subr.bf16.mxu0 0
    %874 = vmatpush1.bf16.msra.mxu0 0
    %875 = vmatprep.subr.bf16.mxu0 0
    %876 = vmatpush1.bf16.msra.mxu0 0
    %877 = vmatprep.subr.bf16.mxu0 0
    %878 = vmatpush1.bf16.msra.mxu0 0
    %879 = vmatprep.subr.bf16.mxu0 0
    %880 = vmatpush1.bf16.msra.mxu0 0
    %881 = vmatprep.subr.bf16.mxu0 %v641
    %882 = vmatpush1.bf16.msra.mxu0 %v640
    %883 = vmatprep.subr.bf16.mxu0 0
    %884 = vmatpush2.bf16.msra.mxu0 0
    %885 = vmatprep.subr.bf16.mxu0 0
    %886 = vmatpush2.bf16.msra.mxu0 0
    %887 = vmatprep.subr.bf16.mxu0 0
    %888 = vmatpush2.bf16.msra.mxu0 0
    %889 = vmatprep.subr.bf16.mxu0 0
    %890 = vmatpush2.bf16.msra.mxu0 0
    %891 = vmatprep.subr.bf16.mxu0 0
    %892 = vmatpush2.bf16.msra.mxu0 0
    %893 = vmatprep.subr.bf16.mxu0 0
    %894 = vmatpush2.bf16.msra.mxu0 0
    %895 = vmatprep.subr.bf16.mxu0 0
    %896 = vmatpush2.bf16.msra.mxu0 0
    %897 = vmatprep.subr.bf16.mxu0 0
    %898 = vmatpush2.bf16.msra.mxu0 0
    %899 = vmatprep.mubr.bf16.mxu0 0
    %900 = vmatmul.mubr.bf16.gmra.mxu0 %v742
    %v901 = vpop.f32.mrf.mxu0
    %v902 = vadd.f32 %v861, %v901
    %v903 = vpop.f32.mrf.mxu0
    %v904 = vadd.f32 %v863, %v903
    %v905 = vpop.f32.mrf.mxu0
    %v906 = vpop.f32.mrf.mxu0
    %907 = vdwg.mxu0
    %v908 = vmax.f32 %v902, 0.0
    %v909 = vmax.f32 %v904, 0.0
    %v910 = vpack.c.bf16 %v908, %v908
    %v911 = vpack.c.bf16 %v909, %v909
    %v912 = vld [vmem:[#allocation7] sm:$0xf]
    %v913 = vld [vmem:[#allocation7 + $0x4] sm:$0xf]
    %v914 = vld [vmem:[#allocation7 + $0x8] sm:$0xf]
    %v915 = vld [vmem:[#allocation7 + $0xc] sm:$0xf]
    %v916 = vld [vmem:[#allocation7 + $0x10] sm:$0xf]
    %v917 = vld [vmem:[#allocation7 + $0x14] sm:$0xf]
    %v918 = vld [vmem:[#allocation7 + $0x18] sm:$0xf]
    %v919 = vld [vmem:[#allocation7 + $0x1c] sm:$0xf]
    %v920 = vld [vmem:[#allocation7 + $0x20] sm:$0xf]
    %v921 = vld [vmem:[#allocation7 + $0x24] sm:$0xf]
    %v922 = vld [vmem:[#allocation7 + $0x28] sm:$0xf]
    %v923 = vld [vmem:[#allocation7 + $0x2c] sm:$0xf]
    %v924 = vld [vmem:[#allocation7 + $0x30] sm:$0xf]
    %v925 = vld [vmem:[#allocation7 + $0x34] sm:$0xf]
    %v926 = vld [vmem:[#allocation7 + $0x38] sm:$0xf]
    %v927 = vld [vmem:[#allocation7 + $0x3c] sm:$0xf]
    %v928 = vld [vmem:[#allocation7 + $0x40] sm:$0xf]
    %v929 = vld [vmem:[#allocation7 + $0x44] sm:$0xf]
    %v930 = vld [vmem:[#allocation7 + $0x48] sm:$0xf]
    %v931 = vld [vmem:[#allocation7 + $0x4c] sm:$0xf]
    %v932 = vld [vmem:[#allocation7 + $0x50] sm:$0xf]
    %v933 = vld [vmem:[#allocation7 + $0x54] sm:$0xf]
    %v934 = vld [vmem:[#allocation7 + $0x58] sm:$0xf]
    %v935 = vld [vmem:[#allocation7 + $0x5c] sm:$0xf]
    %v936 = vld [vmem:[#allocation7 + $0x60] sm:$0xf]
    %v937 = vld [vmem:[#allocation7 + $0x64] sm:$0xf]
    %v938 = vld [vmem:[#allocation7 + $0x68] sm:$0xf]
    %v939 = vld [vmem:[#allocation7 + $0x6c] sm:$0xf]
    %v940 = vld [vmem:[#allocation7 + $0x70] sm:$0xf]
    %v941 = vld [vmem:[#allocation7 + $0x74] sm:$0xf]
    %v942 = vld [vmem:[#allocation7 + $0x78] sm:$0xf]
    %v943 = vld [vmem:[#allocation7 + $0x7c] sm:$0xf]
    %v944 = vld [vmem:[%s4] sm:$0x1]
    %v946 = vlaneseq
    %v947 = vshrl.u32 %v946, 7
    %v948 = vsub.s32 0, %v947
    %v949 = vrot.slane %v944, %v948
    %v983 = vunpack.c.l.b16 %v912
    %v984 = vunpack.c.l.b16 %v913
    %v985 = vunpack.c.l.b16 %v914
    %v986 = vunpack.c.l.b16 %v915
    %v987 = vunpack.c.l.b16 %v916
    %v988 = vunpack.c.l.b16 %v917
    %v989 = vunpack.c.l.b16 %v918
    %v990 = vunpack.c.l.b16 %v919
    %v991 = vunpack.c.l.b16 %v920
    %v992 = vunpack.c.l.b16 %v921
    %v993 = vunpack.c.l.b16 %v922
    %v994 = vunpack.c.l.b16 %v923
    %v995 = vunpack.c.l.b16 %v924
    %v996 = vunpack.c.l.b16 %v925
    %v997 = vunpack.c.l.b16 %v926
    %v998 = vunpack.c.l.b16 %v927
    %v999 = vunpack.c.l.b16 %v928
    %v1000 = vunpack.c.l.b16 %v929
    %v1001 = vunpack.c.l.b16 %v930
    %v1002 = vunpack.c.l.b16 %v931
    %v1003 = vunpack.c.l.b16 %v932
    %v1004 = vunpack.c.l.b16 %v933
    %v1005 = vunpack.c.l.b16 %v934
    %v1006 = vunpack.c.l.b16 %v935
    %v1007 = vunpack.c.l.b16 %v936
    %v1008 = vunpack.c.l.b16 %v937
    %v1009 = vunpack.c.l.b16 %v938
    %v1010 = vunpack.c.l.b16 %v939
    %v1011 = vunpack.c.l.b16 %v940
    %v1012 = vunpack.c.l.b16 %v941
    %v1013 = vunpack.c.l.b16 %v942
    %v1014 = vunpack.c.l.b16 %v943
    %v1015 = vpack.c.b16 %v984, %v983
    %v1016 = vpack.c.b16 %v986, %v985
    %v1017 = vpack.c.b16 %v988, %v987
    %v1018 = vpack.c.b16 %v990, %v989
    %v1019 = vpack.c.b16 %v992, %v991
    %v1020 = vpack.c.b16 %v994, %v993
    %v1021 = vpack.c.b16 %v996, %v995
    %v1022 = vpack.c.b16 %v998, %v997
    %v1023 = vpack.c.b16 %v1000, %v999
    %v1024 = vpack.c.b16 %v1002, %v1001
    %v1025 = vpack.c.b16 %v1004, %v1003
    %v1026 = vpack.c.b16 %v1006, %v1005
    %v1027 = vpack.c.b16 %v1008, %v1007
    %v1028 = vpack.c.b16 %v1010, %v1009
    %v1029 = vpack.c.b16 %v1012, %v1011
    %v1030 = vpack.c.b16 %v1014, %v1013
    %1047 = vmatprep.subr.bf16.mxu0 0
    %1048 = vmatpush1.bf16.msra.mxu0 %v1022
    %1049 = vmatprep.subr.bf16.mxu0 0
    %1050 = vmatpush1.bf16.msra.mxu0 %v1021
    %1051 = vmatprep.subr.bf16.mxu0 0
    %1052 = vmatpush1.bf16.msra.mxu0 %v1020
    %1053 = vmatprep.subr.bf16.mxu0 0
    %1054 = vmatpush1.bf16.msra.mxu0 %v1019
    %1055 = vmatprep.subr.bf16.mxu0 0
    %1056 = vmatpush1.bf16.msra.mxu0 %v1018
    %1057 = vmatprep.subr.bf16.mxu0 0
    %1058 = vmatpush1.bf16.msra.mxu0 %v1017
    %1059 = vmatprep.subr.bf16.mxu0 0
    %1060 = vmatpush1.bf16.msra.mxu0 %v1016
    %1061 = vmatprep.subr.bf16.mxu0 0
    %1062 = vmatpush1.bf16.msra.mxu0 %v1015
    %1063 = vmatprep.subr.bf16.mxu0 0
    %1064 = vmatpush2.bf16.msra.mxu0 %v1030
    %1065 = vmatprep.subr.bf16.mxu0 0
    %1066 = vmatpush2.bf16.msra.mxu0 %v1029
    %1067 = vmatprep.subr.bf16.mxu0 0
    %1068 = vmatpush2.bf16.msra.mxu0 %v1028
    %1069 = vmatprep.subr.bf16.mxu0 0
    %1070 = vmatpush2.bf16.msra.mxu0 %v1027
    %1071 = vmatprep.subr.bf16.mxu0 0
    %1072 = vmatpush2.bf16.msra.mxu0 %v1026
    %1073 = vmatprep.subr.bf16.mxu0 0
    %1074 = vmatpush2.bf16.msra.mxu0 %v1025
    %1075 = vmatprep.subr.bf16.mxu0 0
    %1076 = vmatpush2.bf16.msra.mxu0 %v1024
    %1077 = vmatprep.subr.bf16.mxu0 0
    %1078 = vmatpush2.bf16.msra.mxu0 %v1023
    %1079 = vmatprep.mubr.bf16.mxu0 %v911
    %1080 = vmatmul.mubr.bf16.gmra.mxu0 %v910
    %v1081 = vpop.f32.mrf.mxu0
    %v1082 = vadd.f32 %v949, %v1081
    %v1083 = vpop.f32.mrf.mxu0
    %v1084 = vpop.f32.mrf.mxu0
    %v1085 = vpop.f32.mrf.mxu0
    %1086 = vdwg.mxu0
    %v1087 = vld [vmem:[#allocation8] sm:$0xf]
    %v1088 = vld [vmem:[#allocation8 + $0x4] sm:$0xf]
    %v1089 = vld [vmem:[#allocation8 + $0x8] sm:$0xf]
    %v1090 = vld [vmem:[#allocation8 + $0xc] sm:$0xf]
    %v1091 = vld [vmem:[#allocation8 + $0x10] sm:$0xf]
    %v1092 = vld [vmem:[#allocation8 + $0x14] sm:$0xf]
    %v1093 = vld [vmem:[#allocation8 + $0x18] sm:$0xf]
    %v1094 = vld [vmem:[#allocation8 + $0x1c] sm:$0xf]
    %v1095 = vld [vmem:[#allocation8 + $0x20] sm:$0xf]
    %v1096 = vld [vmem:[#allocation8 + $0x24] sm:$0xf]
    %v1097 = vld [vmem:[#allocation8 + $0x28] sm:$0xf]
    %v1098 = vld [vmem:[#allocation8 + $0x2c] sm:$0xf]
    %v1099 = vld [vmem:[#allocation8 + $0x30] sm:$0xf]
    %v1100 = vld [vmem:[#allocation8 + $0x34] sm:$0xf]
    %v1101 = vld [vmem:[#allocation8 + $0x38] sm:$0xf]
    %v1102 = vld [vmem:[#allocation8 + $0x3c] sm:$0xf]
    %v1103 = vld [vmem:[#allocation8 + $0x40] sm:$0xf]
    %v1104 = vld [vmem:[#allocation8 + $0x44] sm:$0xf]
    %v1105 = vld [vmem:[#allocation8 + $0x48] sm:$0xf]
    %v1106 = vld [vmem:[#allocation8 + $0x4c] sm:$0xf]
    %v1107 = vld [vmem:[#allocation8 + $0x50] sm:$0xf]
    %v1108 = vld [vmem:[#allocation8 + $0x54] sm:$0xf]
    %v1109 = vld [vmem:[#allocation8 + $0x58] sm:$0xf]
    %v1110 = vld [vmem:[#allocation8 + $0x5c] sm:$0xf]
    %v1111 = vld [vmem:[#allocation8 + $0x60] sm:$0xf]
    %v1112 = vld [vmem:[#allocation8 + $0x64] sm:$0xf]
    %v1113 = vld [vmem:[#allocation8 + $0x68] sm:$0xf]
    %v1114 = vld [vmem:[#allocation8 + $0x6c] sm:$0xf]
    %v1115 = vld [vmem:[#allocation8 + $0x70] sm:$0xf]
    %v1116 = vld [vmem:[#allocation8 + $0x74] sm:$0xf]
    %v1117 = vld [vmem:[#allocation8 + $0x78] sm:$0xf]
    %v1118 = vld [vmem:[#allocation8 + $0x7c] sm:$0xf]
    %v1119 = vld [vmem:[%s6] sm:$0x1]
    %v1121 = vlaneseq
    %v1122 = vshrl.u32 %v1121, 7
    %v1123 = vsub.s32 0, %v1122
    %v1124 = vrot.slane %v1119, %v1123
    %v1158 = vunpack.c.l.b16 %v1087
    %v1159 = vunpack.c.l.b16 %v1088
    %v1160 = vunpack.c.l.b16 %v1089
    %v1161 = vunpack.c.l.b16 %v1090
    %v1162 = vunpack.c.l.b16 %v1091
    %v1163 = vunpack.c.l.b16 %v1092
    %v1164 = vunpack.c.l.b16 %v1093
    %v1165 = vunpack.c.l.b16 %v1094
    %v1166 = vunpack.c.l.b16 %v1095
    %v1167 = vunpack.c.l.b16 %v1096
    %v1168 = vunpack.c.l.b16 %v1097
    %v1169 = vunpack.c.l.b16 %v1098
    %v1170 = vunpack.c.l.b16 %v1099
    %v1171 = vunpack.c.l.b16 %v1100
    %v1172 = vunpack.c.l.b16 %v1101
    %v1173 = vunpack.c.l.b16 %v1102
    %v1174 = vunpack.c.l.b16 %v1103
    %v1175 = vunpack.c.l.b16 %v1104
    %v1176 = vunpack.c.l.b16 %v1105
    %v1177 = vunpack.c.l.b16 %v1106
    %v1178 = vunpack.c.l.b16 %v1107
    %v1179 = vunpack.c.l.b16 %v1108
    %v1180 = vunpack.c.l.b16 %v1109
    %v1181 = vunpack.c.l.b16 %v1110
    %v1182 = vunpack.c.l.b16 %v1111
    %v1183 = vunpack.c.l.b16 %v1112
    %v1184 = vunpack.c.l.b16 %v1113
    %v1185 = vunpack.c.l.b16 %v1114
    %v1186 = vunpack.c.l.b16 %v1115
    %v1187 = vunpack.c.l.b16 %v1116
    %v1188 = vunpack.c.l.b16 %v1117
    %v1189 = vunpack.c.l.b16 %v1118
    %v1190 = vpack.c.b16 %v1159, %v1158
    %v1191 = vpack.c.b16 %v1161, %v1160
    %v1192 = vpack.c.b16 %v1163, %v1162
    %v1193 = vpack.c.b16 %v1165, %v1164
    %v1194 = vpack.c.b16 %v1167, %v1166
    %v1195 = vpack.c.b16 %v1169, %v1168
    %v1196 = vpack.c.b16 %v1171, %v1170
    %v1197 = vpack.c.b16 %v1173, %v1172
    %v1198 = vpack.c.b16 %v1175, %v1174
    %v1199 = vpack.c.b16 %v1177, %v1176
    %v1200 = vpack.c.b16 %v1179, %v1178
    %v1201 = vpack.c.b16 %v1181, %v1180
    %v1202 = vpack.c.b16 %v1183, %v1182
    %v1203 = vpack.c.b16 %v1185, %v1184
    %v1204 = vpack.c.b16 %v1187, %v1186
    %v1205 = vpack.c.b16 %v1189, %v1188
    %1222 = vmatprep.subr.bf16.mxu0 0
    %1223 = vmatpush1.bf16.msra.mxu0 %v1197
    %1224 = vmatprep.subr.bf16.mxu0 0
    %1225 = vmatpush1.bf16.msra.mxu0 %v1196
    %1226 = vmatprep.subr.bf16.mxu0 0
    %1227 = vmatpush1.bf16.msra.mxu0 %v1195
    %1228 = vmatprep.subr.bf16.mxu0 0
    %1229 = vmatpush1.bf16.msra.mxu0 %v1194
    %1230 = vmatprep.subr.bf16.mxu0 0
    %1231 = vmatpush1.bf16.msra.mxu0 %v1193
    %1232 = vmatprep.subr.bf16.mxu0 0
    %1233 = vmatpush1.bf16.msra.mxu0 %v1192
    %1234 = vmatprep.subr.bf16.mxu0 0
    %1235 = vmatpush1.bf16.msra.mxu0 %v1191
    %1236 = vmatprep.subr.bf16.mxu0 0
    %1237 = vmatpush1.bf16.msra.mxu0 %v1190
    %1238 = vmatprep.subr.bf16.mxu0 0
    %1239 = vmatpush2.bf16.msra.mxu0 %v1205
    %1240 = vmatprep.subr.bf16.mxu0 0
    %1241 = vmatpush2.bf16.msra.mxu0 %v1204
    %1242 = vmatprep.subr.bf16.mxu0 0
    %1243 = vmatpush2.bf16.msra.mxu0 %v1203
    %1244 = vmatprep.subr.bf16.mxu0 0
    %1245 = vmatpush2.bf16.msra.mxu0 %v1202
    %1246 = vmatprep.subr.bf16.mxu0 0
    %1247 = vmatpush2.bf16.msra.mxu0 %v1201
    %1248 = vmatprep.subr.bf16.mxu0 0
    %1249 = vmatpush2.bf16.msra.mxu0 %v1200
    %1250 = vmatprep.subr.bf16.mxu0 0
    %1251 = vmatpush2.bf16.msra.mxu0 %v1199
    %1252 = vmatprep.subr.bf16.mxu0 0
    %1253 = vmatpush2.bf16.msra.mxu0 %v1198
    %1254 = vmatprep.mubr.bf16.mxu0 %v911
    %1255 = vmatmul.mubr.bf16.gmra.mxu0 %v910
    %v1256 = vpop.f32.mrf.mxu0
    %v1257 = vadd.f32 %v1124, %v1256
    %v1258 = vpop.f32.mrf.mxu0
    %v1259 = vpop.f32.mrf.mxu0
    %v1260 = vpop.f32.mrf.mxu0
    %1261 = vdwg.mxu0
    %1262 = vst [vmem:[#allocation10] sm:$0x3] %v1082
    %1263 = vst [vmem:[#allocation11] sm:$0x3] %v1257
    // Predicated region
    $region46: #{tpu_custom_call.1} parent=1 // pred_check
      _
    $region47: #{tpu_custom_call.1} parent=1 // pred_check_branch
      %1265 = sbr.rel (0) target = $region49
    $region48: #{tpu_custom_call.1} parent=1 // pred_region
      %s1267 = ssub.s32 32, 32
      %1268 = vsyncadd [#allocation4], %s1267
      %s1270 = sshll.u32 [#allocation10], 4
      %s1271 = int_to_ptr.vmem [resolvable:$true] %s1270
      %1273 = dma.vmem_to_hbm [thread:$0]  %s1271, 32, %s7, [#allocation4]
    $region49: #{tpu_custom_call.1} parent=1 // pred_fallthru
      _
    // Predicated region
    $region50: #{tpu_custom_call.1} parent=1 // pred_check
      _
    $region51: #{tpu_custom_call.1} parent=1 // pred_check_branch
      %1275 = sbr.rel (0) target = $region53
    $region52: #{tpu_custom_call.1} parent=1 // pred_region
      %s1277 = ssub.s32 32, 32
      %1278 = vsyncadd [#allocation12], %s1277
      %s1280 = sshll.u32 [#allocation11], 4
      %s1281 = int_to_ptr.vmem [resolvable:$true] %s1280
      %1283 = dma.vmem_to_hbm [thread:$0]  %s1281, 32, %s8, [#allocation12]
    $region53: #{tpu_custom_call.1} parent=1 // pred_fallthru
      _
    // Predicated region
    $region54: #{tpu_custom_call.1} parent=1 // pred_check
      _
    $region55: #{tpu_custom_call.1} parent=1 // pred_check_branch
      %1285 = sbr.rel (0) target = $region57
    $region56: #{tpu_custom_call.1} parent=1 // pred_region
      %1286 = dma.done [#allocation4], 32
    $region57: #{tpu_custom_call.1} parent=1 // pred_fallthru
      _
    // Predicated region
    $region58: #{tpu_custom_call.1} parent=1 // pred_check
      _
    $region59: #{tpu_custom_call.1} parent=1 // pred_check_branch
      %1288 = sbr.rel (0) target = $region61
    $region60: #{tpu_custom_call.1} parent=1 // pred_region
      %1289 = dma.done [#allocation12], 32
    $region61: #{tpu_custom_call.1} parent=1 // pred_fallthru
      _
    %1290 = vsyncpa [#allocation3], 1
    %1291 = vsyncpa [#allocation6], 1
    %1292 = vsyncpa [#allocation9], 1
    %1293 = vsyncpa [#allocation4], 1
    %1294 = vsyncpa [#allocation12], 1

</llo_original>
